<compile_context>
chip_gen: v7x
topology: tpu7x:2x2x1
jax: 0.10.0
libtpu: 0.0.40
codegen_flags: <defaults>
</compile_context>

<pallas_src>
import functools

import numpy as np

import jax
import jax.numpy as jnp
from jax.experimental import pallas as pl
from jax.experimental.pallas import tpu as pltpu


# calculate_theta2(d=2) evaluated offline (sympy/scipy only needed at module
# construction time).  Rows = filters, cols = polynomial coefficients theta[k].
THETAS_D2 = (
    (3.0, -3.0, 0.75),
    (0.0, 3.0, -1.5),
    (0.0, 0.0, 0.75),
)


def _bwgnn_kernel(adjc_ref, xt_ref, w1_ref, b1_ref, w2_ref, b2_ref, out_ref,
                  adjt_sc, deg_sc, dinv_sc, h_sc, f_sc,
                  *, thetas, n_chunks, tile_r, hidden, encoding):
    num_filters = len(thetas)
    k_order = len(thetas[0])
    i = pl.program_id(0)

    # ---- Phase 0 (first grid step): front MLP in transposed lane-dense layout:
    #      hT = relu(W2 @ relu(W1 @ xT + b1) + b2), bf16 MXU with f32 accumulation.
    @pl.when(i == 0)
    def _init():
        deg_sc[...] = jnp.zeros_like(deg_sc)
        h1 = jnp.dot(w1_ref[...], xt_ref[...], preferred_element_type=jnp.float32)
        h1 = jnp.maximum(h1 + b1_ref[...], 0.0)
        h2 = jnp.dot(w2_ref[...], h1.astype(jnp.bfloat16),
                     preferred_element_type=jnp.float32)
        h_sc[...] = jnp.maximum(h2 + b2_ref[...], 0.0)

    # ---- Phase 1 (grid steps [0, n_chunks)): stream the int8 adjacency in row
    #      chunks, upcast to the resident bf16 copy and accumulate in-degrees via
    #      a ones @ chunk MXU matvec (exact f32 accumulation).  The next chunk's
    #      DMA overlaps this compute through the BlockSpec pipeline.
    @pl.when(i < n_chunks)
    def _load_chunk():
        chunk = adjc_ref[...].astype(jnp.bfloat16)            # 0/1 exact in bf16
        row0 = pl.multiple_of(i * tile_r, tile_r)
        adjt_sc[pl.ds(row0, tile_r), :] = chunk
        ones = jnp.ones((8, tile_r), dtype=jnp.bfloat16)
        csum = jnp.dot(ones, chunk, preferred_element_type=jnp.float32)  # [8, N]
        deg_sc[...] += csum[0:1, :]

    # ---- Phase 2 start: finalize D^-1/2, seed the recursion and the output.
    @pl.when(i == n_chunks)
    def _start():
        dinv_sc[...] = jax.lax.rsqrt(jnp.maximum(deg_sc[...], 1.0))
        h = h_sc[...]
        f_sc[...] = h
        for fi in range(num_filters):
            out_ref[fi * hidden:(fi + 1) * hidden, :] = thetas[fi][0] * h

    # ---- Phase 2 (grid steps [n_chunks, n_chunks + K - 1)): shared Laplacian
    #      recursion f <- f - D^-1/2 (A (D^-1/2 f)), accumulated per beta filter
    #      directly into the VMEM-resident output block.
    @pl.when(i >= n_chunks)
    def _laplacian_step():
        k_rel = i - n_chunks                                   # 0-based step index
        dinv = dinv_sc[...]
        scaled = (f_sc[...] * dinv).astype(jnp.bfloat16)       # column-side D^-1/2
        agg = jnp.dot(scaled, adjt_sc[...],                    # [H,N] @ [N,N] bf16 MXU
                      preferred_element_type=jnp.float32)
        f_new = f_sc[...] - dinv * agg                         # row-side D^-1/2 post-matmul
        f_sc[...] = f_new
        for fi in range(num_filters):
            # thetas are static module constants -> pick this step's coefficient
            # with cheap scalar selects (no SMEM gather needed).
            coef = jnp.float32(0.0)
            for kk in range(1, k_order):
                coef = jnp.where(k_rel == kk - 1, jnp.float32(thetas[fi][kk]), coef)
            out_ref[fi * hidden:(fi + 1) * hidden, :] += coef * f_new

    if encoding:
        @pl.when(i == n_chunks + k_order - 2)
        def _relu_out():
            out_ref[...] = jnp.maximum(out_ref[...], 0.0)


def bwgnn_forward(adj, x, thetas, w1, b1, w2, b2, *, encoding=False):
    """BWGNN forward.

    adj   : [N, N] 0/1 dense adjacency, adj[dst, src] (DGL copy_u/sum == adj @ h).
    x     : [N, in_dim] node features.
    thetas: static [F][K] beta-kernel coefficients (calculate_theta2 output).
    w1/b1 : [H, in_dim], [H]   (PyTorch nn.Linear layout, BWGNN.linear)
    w2/b2 : [H, H],      [H]   (BWGNN.linear2)
    Returns [N, F*H] float32 (concatenated PolyConv outputs).
    """
    thetas_t = tuple(tuple(float(v) for v in row) for row in np.asarray(thetas))
    num_filters, k_order = len(thetas_t), len(thetas_t[0])
    assert k_order >= 2, "BWGNN beta kernels need polynomial order K >= 2"

    n, in_dim = x.shape
    hidden = int(w1.shape[0])
    out_dim = num_filters * hidden

    # Pad the node axis to a lane-friendly multiple of 128.  Padded nodes are
    # isolated (zero adjacency rows/cols) so they cannot influence real nodes.
    n_pad = max(128, ((n + 127) // 128) * 128)
    if n_pad >= 512 and n_pad % 512 == 0:
        tile_r = 512
    elif n_pad >= 256 and n_pad % 256 == 0:
        tile_r = 256
    else:
        tile_r = 128
    n_chunks = n_pad // tile_r
    grid = (n_chunks + k_order - 1,)

    # adjT[src, dst] as int8 in HBM (0/1 exact, half the bytes of bf16).
    adj_t = jnp.zeros((n_pad, n_pad), jnp.int8).at[:n, :n].set(
        jnp.transpose(adj).astype(jnp.int8))
    x_t = jnp.zeros((in_dim, n_pad), jnp.bfloat16).at[:, :n].set(
        jnp.transpose(x).astype(jnp.bfloat16))
    w1_b = w1.astype(jnp.bfloat16)
    w2_b = w2.astype(jnp.bfloat16)
    b1_c = b1.reshape(hidden, 1).astype(jnp.float32)
    b2_c = b2.reshape(hidden, 1).astype(jnp.float32)

    kernel = functools.partial(
        _bwgnn_kernel, thetas=thetas_t, n_chunks=n_chunks, tile_r=tile_r,
        hidden=hidden, encoding=encoding)

    # Generation-aware VMEM budget (all live buffers accounted for).
    try:
        vmem_cap = int(pltpu.get_tpu_info().vmem_capacity_bytes)
    except Exception:
        vmem_cap = 64 * 1024 * 1024
    vmem_need = (2 * n_pad * n_pad                 # resident bf16 adjacency scratch
                 + 2 * tile_r * n_pad              # double-buffered int8 chunk blocks
                 + 2 * in_dim * n_pad * 2          # x^T (bf16)
                 + 2 * out_dim * n_pad * 4         # output block (f32)
                 + (2 * hidden + 2) * n_pad * 4    # h, f, deg, dinv scratch
                 + 2 * hidden * n_pad * 2          # bf16 'scaled' matmul operand temp
                 + (hidden * in_dim + hidden * hidden) * 2 + 8 * hidden)
    vmem_limit = int(min(vmem_cap - 2 * 1024 * 1024,
                         max(32 * 1024 * 1024, vmem_need + 16 * 1024 * 1024)))

    flops = (2 * hidden * (in_dim + hidden) * n_pad
             + 2 * 8 * n_pad * n_pad
             + (k_order - 1) * 2 * hidden * n_pad * n_pad
             + (k_order - 1) * (num_filters + 3) * hidden * n_pad)
    bytes_accessed = (n_pad * n_pad + in_dim * n_pad * 2 + out_dim * n_pad * 4
                      + (hidden * in_dim + hidden * hidden) * 2 + 8 * hidden)

    out_t = pl.pallas_call(
        kernel,
        out_shape=jax.ShapeDtypeStruct((out_dim, n_pad), jnp.float32),
        grid=grid,
        in_specs=[
            # int8 adjacency row chunks; clamp the block index so recursion steps
            # reuse the last block (no extra DMA).
            pl.BlockSpec((tile_r, n_pad),
                         lambda i: (jnp.minimum(i, n_chunks - 1), 0)),
            pl.BlockSpec((in_dim, n_pad), lambda i: (0, 0)),      # x^T (bf16)
            pl.BlockSpec((hidden, in_dim), lambda i: (0, 0)),     # W1
            pl.BlockSpec((hidden, 1), lambda i: (0, 0)),          # b1
            pl.BlockSpec((hidden, hidden), lambda i: (0, 0)),     # W2
            pl.BlockSpec((hidden, 1), lambda i: (0, 0)),          # b2
        ],
        out_specs=pl.BlockSpec((out_dim, n_pad), lambda i: (0, 0)),
        scratch_shapes=[
            pltpu.VMEM((n_pad, n_pad), jnp.bfloat16),   # resident bf16 adjacency
            pltpu.VMEM((1, n_pad), jnp.float32),        # in-degree accumulator
            pltpu.VMEM((1, n_pad), jnp.float32),        # D^-1/2
            pltpu.VMEM((hidden, n_pad), jnp.float32),   # h  (MLP output)
            pltpu.VMEM((hidden, n_pad), jnp.float32),   # f  (recursion carry)
        ],
        compiler_params=pltpu.CompilerParams(
            dimension_semantics=("arbitrary",),
            vmem_limit_bytes=vmem_limit),
        cost_estimate=pl.CostEstimate(flops=int(flops), transcendentals=int(n_pad),
                                      bytes_accessed=int(bytes_accessed)),
    )(adj_t, x_t, w1_b, b1_c, w2_b, b2_c)

    return jnp.transpose(out_t[:, :n])


def bwgnn_ref(adj, x, thetas, w1, b1, w2, b2, *, encoding=False):
    """Pure-JAX f32 reference matching the PyTorch BWGNN forward semantics."""
    deg = jnp.maximum(adj.sum(axis=1), 1.0)
    dinv = (deg ** -0.5)[:, None]
    h = jnp.maximum(x @ w1.T + b1, 0.0)
    h = jnp.maximum(h @ w2.T + b2, 0.0)
    outs = []
    for fi in range(thetas.shape[0]):
        f = h
        acc = thetas[fi, 0] * f
        for k in range(1, thetas.shape[1]):
            f = f - (adj @ (f * dinv)) * dinv
            acc = acc + thetas[fi, k] * f
        outs.append(acc)
    out = jnp.concatenate(outs, axis=-1)
    if encoding:
        out = jnp.maximum(out, 0.0)
    return out


if __name__ == "__main__":
    key = jax.random.PRNGKey(0)
    k_adj, k_x, k_w1, k_b1, k_w2, k_b2 = jax.random.split(key, 6)

    N = 64          # nodes
    IN_DIM = 32     # input feature dim
    HIDDEN = 32     # num_hidden
    D = 2           # BWGNN default -> 3 filters, K = 3 coefficients each

    thetas = THETAS_D2

    # Random undirected graph (symmetric 0/1 adjacency, no self loops).
    upper = (jax.random.uniform(k_adj, (N, N)) < 0.1).astype(jnp.float32)
    upper = jnp.triu(upper, k=1)
    adj = upper + upper.T

    x = jax.random.normal(k_x, (N, IN_DIM), dtype=jnp.float32)

    def linear_params(kw, kb, fan_in, fan_out):
        bound = 1.0 / (fan_in ** 0.5)                       # torch Linear default init
        w = jax.random.uniform(kw, (fan_out, fan_in), minval=-bound, maxval=bound)
        b = jax.random.uniform(kb, (fan_out,), minval=-bound, maxval=bound)
        return w.astype(jnp.float32), b.astype(jnp.float32)

    w1, b1 = linear_params(k_w1, k_b1, IN_DIM, HIDDEN)      # [H, in_dim], [H]
    w2, b2 = linear_params(k_w2, k_b2, HIDDEN, HIDDEN)

    out = bwgnn_forward(adj, x, thetas, w1, b1, w2, b2, encoding=False)
    out = jax.block_until_ready(out)

    ref = bwgnn_ref(adj, x, jnp.array(thetas, jnp.float32), w1, b1, w2, b2,
                    encoding=False)
    assert out.shape == (N, (D + 1) * HIDDEN)
    max_err = float(jnp.max(jnp.abs(out - ref)))
    # bf16 MLP + bf16 adjacency path on the MXU with f32 accumulation.
    assert jnp.allclose(out, ref, rtol=5e-2, atol=1e-1), max_err

    print("KERNEL_OK")
</pallas_src>

<mosaic_0001>
module attributes {stable_mosaic.version = 11 : i64} {
  func.func @_bwgnn_kernel(%arg0: i32, %arg1: memref<128x128xi8, #tpu.memory_space<vmem>>, %arg2: memref<32x128xbf16, #tpu.memory_space<vmem>>, %arg3: memref<32x32xbf16, #tpu.memory_space<vmem>>, %arg4: memref<32x1xf32, #tpu.memory_space<vmem>>, %arg5: memref<32x32xbf16, #tpu.memory_space<vmem>>, %arg6: memref<32x1xf32, #tpu.memory_space<vmem>>, %arg7: memref<96x128xf32, #tpu.memory_space<vmem>>, %arg8: memref<128x128xbf16, #tpu.memory_space<vmem>>, %arg9: memref<1x128xf32, #tpu.memory_space<vmem>>, %arg10: memref<1x128xf32, #tpu.memory_space<vmem>>, %arg11: memref<32x128xf32, #tpu.memory_space<vmem>>, %arg12: memref<32x128xf32, #tpu.memory_space<vmem>>) attributes {dimension_semantics = [#tpu.dimension_semantics<arbitrary>], iteration_bounds = array<i64: 3>, scalar_prefetch = 0 : i64, scratch_operands = 5 : i64, tpu.core_type = #tpu.core_type<tc>, window_params = [{transform_indices = @transform_0, window_bounds = array<i64: 128, 128>}, {pipeline_mode = #tpu.pipeline_mode<synchronous>, transform_indices = @transform_1, window_bounds = array<i64: 32, 128>}, {pipeline_mode = #tpu.pipeline_mode<synchronous>, transform_indices = @transform_2, window_bounds = array<i64: 32, 32>}, {pipeline_mode = #tpu.pipeline_mode<synchronous>, transform_indices = @transform_3, window_bounds = array<i64: 32, 1>}, {pipeline_mode = #tpu.pipeline_mode<synchronous>, transform_indices = @transform_4, window_bounds = array<i64: 32, 32>}, {pipeline_mode = #tpu.pipeline_mode<synchronous>, transform_indices = @transform_5, window_bounds = array<i64: 32, 1>}, {pipeline_mode = #tpu.pipeline_mode<synchronous>, transform_indices = @transform_6, window_bounds = array<i64: 96, 128>}]} {
    %c0_i32 = arith.constant 0 : i32
    %0 = arith.cmpi eq, %arg0, %c0_i32 : i32
    %1 = arith.extui %0 : i1 to i32
    %c0_i32_0 = arith.constant 0 : i32
    %2 = arith.cmpi ne, %1, %c0_i32_0 : i32
    scf.if %2 {
      %cst = arith.constant 0.000000e+00 : f32
      %12 = vector.broadcast %cst : f32 to vector<1x128xf32>
      %c0 = arith.constant 0 : index
      %c0_6 = arith.constant 0 : index
      %13 = vector.load %arg9[%c0, %c0_6] : memref<1x128xf32, #tpu.memory_space<vmem>>, vector<1x128xf32>
      tpu.vector_store %arg9[%c0, %c0_6], %12 {strides = array<i32>} : memref<1x128xf32, #tpu.memory_space<vmem>>, vector<1x128xf32>,
      %c0_7 = arith.constant 0 : index
      %c0_8 = arith.constant 0 : index
      %14 = vector.load %arg3[%c0_7, %c0_8] : memref<32x32xbf16, #tpu.memory_space<vmem>>, vector<32x32xbf16>
      %c0_9 = arith.constant 0 : index
      %c0_10 = arith.constant 0 : index
      %15 = vector.load %arg2[%c0_9, %c0_10] : memref<32x128xbf16, #tpu.memory_space<vmem>>, vector<32x128xbf16>
      %cst_11 = arith.constant dense<0.000000e+00> : vector<32x128xf32>
      %16 = tpu.matmul %14, %15, %cst_11 {dimension_numbers = #tpu.dot_dimension_numbers<[1], [0], [0], [1], [0, 0, 1, 1], [], []>} : vector<32x32xbf16>, vector<32x128xbf16>, vector<32x128xf32> -> vector<32x128xf32>
      %c0_12 = arith.constant 0 : index
      %c0_13 = arith.constant 0 : index
      %17 = vector.load %arg4[%c0_12, %c0_13] : memref<32x1xf32, #tpu.memory_space<vmem>>, vector<32x1xf32>
      %18 = vector.broadcast %17 : vector<32x1xf32> to vector<32x128xf32>
      %19 = arith.addf %16, %18 : vector<32x128xf32>
      %cst_14 = arith.constant 0.000000e+00 : f32
      %20 = vector.broadcast %cst_14 : f32 to vector<32x128xf32>
      %21 = arith.maximumf %19, %20 : vector<32x128xf32>
      %c0_15 = arith.constant 0 : index
      %c0_16 = arith.constant 0 : index
      %22 = vector.load %arg5[%c0_15, %c0_16] : memref<32x32xbf16, #tpu.memory_space<vmem>>, vector<32x32xbf16>
      %23 = arith.truncf %21 : vector<32x128xf32> to vector<32x128xbf16>
      %cst_17 = arith.constant dense<0.000000e+00> : vector<32x128xf32>
      %24 = tpu.matmul %22, %23, %cst_17 {dimension_numbers = #tpu.dot_dimension_numbers<[1], [0], [0], [1], [0, 0, 1, 1], [], []>} : vector<32x32xbf16>, vector<32x128xbf16>, vector<32x128xf32> -> vector<32x128xf32>
      %c0_18 = arith.constant 0 : index
      %c0_19 = arith.constant 0 : index
      %25 = vector.load %arg6[%c0_18, %c0_19] : memref<32x1xf32, #tpu.memory_space<vmem>>, vector<32x1xf32>
      %26 = vector.broadcast %25 : vector<32x1xf32> to vector<32x128xf32>
      %27 = arith.addf %24, %26 : vector<32x128xf32>
      %cst_20 = arith.constant 0.000000e+00 : f32
      %28 = vector.broadcast %cst_20 : f32 to vector<32x128xf32>
      %29 = arith.maximumf %27, %28 : vector<32x128xf32>
      %c0_21 = arith.constant 0 : index
      %c0_22 = arith.constant 0 : index
      %30 = vector.load %arg11[%c0_21, %c0_22] : memref<32x128xf32, #tpu.memory_space<vmem>>, vector<32x128xf32>
      tpu.vector_store %arg11[%c0_21, %c0_22], %29 {strides = array<i32>} : memref<32x128xf32, #tpu.memory_space<vmem>>, vector<32x128xf32>,
    } else {
    }
    %c1_i32 = arith.constant 1 : i32
    %3 = arith.cmpi slt, %arg0, %c1_i32 : i32
    %4 = arith.extui %3 : i1 to i32
    %c0_i32_1 = arith.constant 0 : i32
    %5 = arith.cmpi ne, %4, %c0_i32_1 : i32
    scf.if %5 {
      %c0 = arith.constant 0 : index
      %c0_6 = arith.constant 0 : index
      %12 = vector.load %arg1[%c0, %c0_6] : memref<128x128xi8, #tpu.memory_space<vmem>>, vector<128x128xi8>
      %13 = arith.sitofp %12 : vector<128x128xi8> to vector<128x128xbf16>
      %c128_i32 = arith.constant 128 : i32
      %14 = arith.muli %arg0, %c128_i32 : i32
      %15 = tpu.assume_multiple %14, 128 : i32
      %16 = arith.index_cast %15 : i32 to index
      %c0_7 = arith.constant 0 : index
      %17 = vector.load %arg8[%16, %c0_7] : memref<128x128xbf16, #tpu.memory_space<vmem>>, vector<128x128xbf16>
      tpu.vector_store %arg8[%16, %c0_7], %13 {strides = array<i32>} : memref<128x128xbf16, #tpu.memory_space<vmem>>, vector<128x128xbf16>,
      %cst = arith.constant 1.000000e+00 : bf16
      %18 = vector.broadcast %cst : bf16 to vector<8x128xbf16>
      %cst_8 = arith.constant dense<0.000000e+00> : vector<8x128xf32>
      %19 = tpu.matmul %18, %13, %cst_8 {dimension_numbers = #tpu.dot_dimension_numbers<[1], [0], [0], [1], [0, 0, 1, 1], [], []>} : vector<8x128xbf16>, vector<128x128xbf16>, vector<8x128xf32> -> vector<8x128xf32>
      %c0_9 = arith.constant 0 : index
      %c0_10 = arith.constant 0 : index
      %20 = vector.load %arg9[%c0_9, %c0_10] : memref<1x128xf32, #tpu.memory_space<vmem>>, vector<1x128xf32>
      %21 = vector.extract_strided_slice %19 {offsets = [0, 0], sizes = [1, 128], strides = [1, 1]} : vector<8x128xf32> to vector<1x128xf32>
      %22 = arith.addf %20, %21 : vector<1x128xf32>
      %c0_11 = arith.constant 0 : index
      %c0_12 = arith.constant 0 : index
      %23 = vector.load %arg9[%c0_11, %c0_12] : memref<1x128xf32, #tpu.memory_space<vmem>>, vector<1x128xf32>
      tpu.vector_store %arg9[%c0_11, %c0_12], %22 {strides = array<i32>} : memref<1x128xf32, #tpu.memory_space<vmem>>, vector<1x128xf32>,
    } else {
    }
    %c1_i32_2 = arith.constant 1 : i32
    %6 = arith.cmpi eq, %arg0, %c1_i32_2 : i32
    %7 = arith.extui %6 : i1 to i32
    %c0_i32_3 = arith.constant 0 : i32
    %8 = arith.cmpi ne, %7, %c0_i32_3 : i32
    scf.if %8 {
      %c0 = arith.constant 0 : index
      %c0_6 = arith.constant 0 : index
      %12 = vector.load %arg9[%c0, %c0_6] : memref<1x128xf32, #tpu.memory_space<vmem>>, vector<1x128xf32>
      %cst = arith.constant 1.000000e+00 : f32
      %13 = vector.broadcast %cst : f32 to vector<1x128xf32>
      %14 = arith.maximumf %12, %13 : vector<1x128xf32>
      %15 = math.rsqrt %14 : vector<1x128xf32>
      %c0_7 = arith.constant 0 : index
      %c0_8 = arith.constant 0 : index
      %16 = vector.load %arg10[%c0_7, %c0_8] : memref<1x128xf32, #tpu.memory_space<vmem>>, vector<1x128xf32>
      tpu.vector_store %arg10[%c0_7, %c0_8], %15 {strides = array<i32>} : memref<1x128xf32, #tpu.memory_space<vmem>>, vector<1x128xf32>,
      %c0_9 = arith.constant 0 : index
      %c0_10 = arith.constant 0 : index
      %17 = vector.load %arg11[%c0_9, %c0_10] : memref<32x128xf32, #tpu.memory_space<vmem>>, vector<32x128xf32>
      %c0_11 = arith.constant 0 : index
      %c0_12 = arith.constant 0 : index
      %18 = vector.load %arg12[%c0_11, %c0_12] : memref<32x128xf32, #tpu.memory_space<vmem>>, vector<32x128xf32>
      tpu.vector_store %arg12[%c0_11, %c0_12], %17 {strides = array<i32>} : memref<32x128xf32, #tpu.memory_space<vmem>>, vector<32x128xf32>,
      %cst_13 = arith.constant 3.000000e+00 : f32
      %19 = vector.broadcast %cst_13 : f32 to vector<32x128xf32>
      %20 = arith.mulf %19, %17 : vector<32x128xf32>
      %c0_14 = arith.constant 0 : index
      %c0_15 = arith.constant 0 : index
      %21 = vector.load %arg7[%c0_14, %c0_15] : memref<96x128xf32, #tpu.memory_space<vmem>>, vector<32x128xf32>
      tpu.vector_store %arg7[%c0_14, %c0_15], %20 {strides = array<i32>} : memref<96x128xf32, #tpu.memory_space<vmem>>, vector<32x128xf32>,
      %cst_16 = arith.constant 0.000000e+00 : f32
      %22 = vector.broadcast %cst_16 : f32 to vector<32x128xf32>
      %23 = arith.mulf %22, %17 : vector<32x128xf32>
      %c32 = arith.constant 32 : index
      %c0_17 = arith.constant 0 : index
      %24 = vector.load %arg7[%c32, %c0_17] : memref<96x128xf32, #tpu.memory_space<vmem>>, vector<32x128xf32>
      tpu.vector_store %arg7[%c32, %c0_17], %23 {strides = array<i32>} : memref<96x128xf32, #tpu.memory_space<vmem>>, vector<32x128xf32>,
      %cst_18 = arith.constant 0.000000e+00 : f32
      %25 = vector.broadcast %cst_18 : f32 to vector<32x128xf32>
      %26 = arith.mulf %25, %17 : vector<32x128xf32>
      %c64 = arith.constant 64 : index
      %c0_19 = arith.constant 0 : index
      %27 = vector.load %arg7[%c64, %c0_19] : memref<96x128xf32, #tpu.memory_space<vmem>>, vector<32x128xf32>
      tpu.vector_store %arg7[%c64, %c0_19], %26 {strides = array<i32>} : memref<96x128xf32, #tpu.memory_space<vmem>>, vector<32x128xf32>,
    } else {
    }
    %c1_i32_4 = arith.constant 1 : i32
    %9 = arith.cmpi sge, %arg0, %c1_i32_4 : i32
    %10 = arith.extui %9 : i1 to i32
    %c0_i32_5 = arith.constant 0 : i32
    %11 = arith.cmpi ne, %10, %c0_i32_5 : i32
    scf.if %11 {
      %c1_i32_6 = arith.constant 1 : i32
      %12 = arith.subi %arg0, %c1_i32_6 : i32
      %c0 = arith.constant 0 : index
      %c0_7 = arith.constant 0 : index
      %13 = vector.load %arg10[%c0, %c0_7] : memref<1x128xf32, #tpu.memory_space<vmem>>, vector<1x128xf32>
      %c0_8 = arith.constant 0 : index
      %c0_9 = arith.constant 0 : index
      %14 = vector.load %arg12[%c0_8, %c0_9] : memref<32x128xf32, #tpu.memory_space<vmem>>, vector<32x128xf32>
      %15 = vector.broadcast %13 : vector<1x128xf32> to vector<32x128xf32>
      %16 = arith.mulf %14, %15 : vector<32x128xf32>
      %17 = arith.truncf %16 : vector<32x128xf32> to vector<32x128xbf16>
      %c0_10 = arith.constant 0 : index
      %c0_11 = arith.constant 0 : index
      %18 = vector.load %arg8[%c0_10, %c0_11] : memref<128x128xbf16, #tpu.memory_space<vmem>>, vector<128x128xbf16>
      %cst = arith.constant dense<0.000000e+00> : vector<32x128xf32>
      %19 = tpu.matmul %17, %18, %cst {dimension_numbers = #tpu.dot_dimension_numbers<[1], [0], [0], [1], [0, 0, 1, 1], [], []>} : vector<32x128xbf16>, vector<128x128xbf16>, vector<32x128xf32> -> vector<32x128xf32>
      %c0_12 = arith.constant 0 : index
      %c0_13 = arith.constant 0 : index
      %20 = vector.load %arg12[%c0_12, %c0_13] : memref<32x128xf32, #tpu.memory_space<vmem>>, vector<32x128xf32>
      %21 = vector.broadcast %13 : vector<1x128xf32> to vector<32x128xf32>
      %22 = arith.mulf %21, %19 : vector<32x128xf32>
      %23 = arith.subf %20, %22 : vector<32x128xf32>
      %c0_14 = arith.constant 0 : index
      %c0_15 = arith.constant 0 : index
      %24 = vector.load %arg12[%c0_14, %c0_15] : memref<32x128xf32, #tpu.memory_space<vmem>>, vector<32x128xf32>
      tpu.vector_store %arg12[%c0_14, %c0_15], %23 {strides = array<i32>} : memref<32x128xf32, #tpu.memory_space<vmem>>, vector<32x128xf32>,
      %c0_i32_16 = arith.constant 0 : i32
      %25 = arith.cmpi eq, %12, %c0_i32_16 : i32
      %cst_17 = arith.constant -3.000000e+00 : f32
      %cst_18 = arith.constant 0.000000e+00 : f32
      %26 = arith.select %25, %cst_17, %cst_18 : f32
      %c1_i32_19 = arith.constant 1 : i32
      %27 = arith.cmpi eq, %12, %c1_i32_19 : i32
      %cst_20 = arith.constant 7.500000e-01 : f32
      %28 = arith.select %27, %cst_20, %26 : f32
      %c0_21 = arith.constant 0 : index
      %c0_22 = arith.constant 0 : index
      %29 = vector.load %arg7[%c0_21, %c0_22] : memref<96x128xf32, #tpu.memory_space<vmem>>, vector<32x128xf32>
      %30 = vector.broadcast %28 : f32 to vector<32x128xf32>
      %31 = arith.mulf %30, %23 : vector<32x128xf32>
      %32 = arith.addf %29, %31 : vector<32x128xf32>
      %c0_23 = arith.constant 0 : index
      %c0_24 = arith.constant 0 : index
      %33 = vector.load %arg7[%c0_23, %c0_24] : memref<96x128xf32, #tpu.memory_space<vmem>>, vector<32x128xf32>
      tpu.vector_store %arg7[%c0_23, %c0_24], %32 {strides = array<i32>} : memref<96x128xf32, #tpu.memory_space<vmem>>, vector<32x128xf32>,
      %c0_i32_25 = arith.constant 0 : i32
      %34 = arith.cmpi eq, %12, %c0_i32_25 : i32
      %cst_26 = arith.constant 3.000000e+00 : f32
      %cst_27 = arith.constant 0.000000e+00 : f32
      %35 = arith.select %34, %cst_26, %cst_27 : f32
      %c1_i32_28 = arith.constant 1 : i32
      %36 = arith.cmpi eq, %12, %c1_i32_28 : i32
      %cst_29 = arith.constant -1.500000e+00 : f32
      %37 = arith.select %36, %cst_29, %35 : f32
      %c32 = arith.constant 32 : index
      %c0_30 = arith.constant 0 : index
      %38 = vector.load %arg7[%c32, %c0_30] : memref<96x128xf32, #tpu.memory_space<vmem>>, vector<32x128xf32>
      %39 = vector.broadcast %37 : f32 to vector<32x128xf32>
      %40 = arith.mulf %39, %23 : vector<32x128xf32>
      %41 = arith.addf %38, %40 : vector<32x128xf32>
      %c32_31 = arith.constant 32 : index
      %c0_32 = arith.constant 0 : index
      %42 = vector.load %arg7[%c32_31, %c0_32] : memref<96x128xf32, #tpu.memory_space<vmem>>, vector<32x128xf32>
      tpu.vector_store %arg7[%c32_31, %c0_32], %41 {strides = array<i32>} : memref<96x128xf32, #tpu.memory_space<vmem>>, vector<32x128xf32>,
      %c0_i32_33 = arith.constant 0 : i32
      %43 = arith.cmpi eq, %12, %c0_i32_33 : i32
      %cst_34 = arith.constant 0.000000e+00 : f32
      %cst_35 = arith.constant 0.000000e+00 : f32
      %44 = arith.select %43, %cst_34, %cst_35 : f32
      %c1_i32_36 = arith.constant 1 : i32
      %45 = arith.cmpi eq, %12, %c1_i32_36 : i32
      %cst_37 = arith.constant 7.500000e-01 : f32
      %46 = arith.select %45, %cst_37, %44 : f32
      %c64 = arith.constant 64 : index
      %c0_38 = arith.constant 0 : index
      %47 = vector.load %arg7[%c64, %c0_38] : memref<96x128xf32, #tpu.memory_space<vmem>>, vector<32x128xf32>
      %48 = vector.broadcast %46 : f32 to vector<32x128xf32>
      %49 = arith.mulf %48, %23 : vector<32x128xf32>
      %50 = arith.addf %47, %49 : vector<32x128xf32>
      %c64_39 = arith.constant 64 : index
      %c0_40 = arith.constant 0 : index
      %51 = vector.load %arg7[%c64_39, %c0_40] : memref<96x128xf32, #tpu.memory_space<vmem>>, vector<32x128xf32>
      tpu.vector_store %arg7[%c64_39, %c0_40], %50 {strides = array<i32>} : memref<96x128xf32, #tpu.memory_space<vmem>>, vector<32x128xf32>,
    } else {
    }
    return
  }
  func.func @transform_0(%arg0: i32) -> (i32, i32) {
    %c0_i32 = arith.constant 0 : i32
    %0 = arith.minsi %arg0, %c0_i32 : i32
    %c0_i32_0 = arith.constant 0 : i32
    %c0_i32_1 = arith.constant 0 : i32
    return %0, %c0_i32_0 : i32, i32
  }
  func.func @transform_1(%arg0: i32) -> (i32, i32) {
    %c0_i32 = arith.constant 0 : i32
    %c0_i32_0 = arith.constant 0 : i32
    %c0_i32_1 = arith.constant 0 : i32
    return %c0_i32, %c0_i32_0 : i32, i32
  }
  func.func @transform_2(%arg0: i32) -> (i32, i32) {
    %c0_i32 = arith.constant 0 : i32
    %c0_i32_0 = arith.constant 0 : i32
    %c0_i32_1 = arith.constant 0 : i32
    return %c0_i32, %c0_i32_0 : i32, i32
  }
  func.func @transform_3(%arg0: i32) -> (i32, i32) {
    %c0_i32 = arith.constant 0 : i32
    %c0_i32_0 = arith.constant 0 : i32
    %c0_i32_1 = arith.constant 0 : i32
    return %c0_i32, %c0_i32_0 : i32, i32
  }
  func.func @transform_4(%arg0: i32) -> (i32, i32) {
    %c0_i32 = arith.constant 0 : i32
    %c0_i32_0 = arith.constant 0 : i32
    %c0_i32_1 = arith.constant 0 : i32
    return %c0_i32, %c0_i32_0 : i32, i32
  }
  func.func @transform_5(%arg0: i32) -> (i32, i32) {
    %c0_i32 = arith.constant 0 : i32
    %c0_i32_0 = arith.constant 0 : i32
    %c0_i32_1 = arith.constant 0 : i32
    return %c0_i32, %c0_i32_0 : i32, i32
  }
  func.func @transform_6(%arg0: i32) -> (i32, i32) {
    %c0_i32 = arith.constant 0 : i32
    %c0_i32_0 = arith.constant 0 : i32
    %c0_i32_1 = arith.constant 0 : i32
    return %c0_i32, %c0_i32_0 : i32, i32
  }
}

</mosaic_0001>

<llo_original>
// kernel: tpu_custom_call.1
$region0: #{tpu_custom_call.1}
  #allocation0 [shape = 'u32[]', space=smem, size = 0x4, offset = 0x4, fixed_abs, tag = 'smem constant byte address 0x4 - core index']
  #allocation1 [shape = 'u32[144,128]{1,0:T(1,128)}', space=vmem, size = 0x12000, scoped, tag = 'internal scratch']
  #allocation2 [shape = 'bf16[128,128]{1,0:T(16,128)(2,1)}', space=vmem, size = 0x8000, scoped, tag = 'scratch operand']
  #allocation3 [shape = 'f32[1,128]{1,0:T(1,128)}', space=vmem, size = 0x200, scoped, tag = 'scratch operand']
  #allocation4 [shape = 'f32[1,128]{1,0:T(1,128)}', space=vmem, size = 0x200, scoped, tag = 'scratch operand']
  #allocation5 [shape = 'f32[32,128]{1,0:T(8,128)}', space=vmem, size = 0x4000, scoped, tag = 'scratch operand']
  #allocation6 [shape = 'f32[32,128]{1,0:T(8,128)}', space=vmem, size = 0x4000, scoped, tag = 'scratch operand']
  %s0 = inlined_call_operand.vmem [shape: s8[128,128], index: 0, kind: input, shape index: {}]
  %s1 = inlined_call_operand.vmem [shape: bf16[32,128], index: 1, kind: input, shape index: {}]
  %s2 = inlined_call_operand.vmem [shape: bf16[32,32], index: 2, kind: input, shape index: {}]
  %s3 = inlined_call_operand.vmem [shape: f32[32,1], index: 3, kind: input, shape index: {}]
  %s4 = inlined_call_operand.vmem [shape: bf16[32,32], index: 4, kind: input, shape index: {}]
  %s5 = inlined_call_operand.vmem [shape: f32[32,1], index: 5, kind: input, shape index: {}]
  %s6 = inlined_call_operand.hbm [shape: f32[96,128], index: 6, kind: output, shape index: {}]
  %s7 = sld [smem:[#allocation0]]
  $region73: #{tpu_custom_call.1} parent=0
    _
  %s9 = ssub.s32 1, %s7
  %s10 = scalar_select 0, %s9, %s7
  $region1: #{tpu_custom_call.1} parent=0
    #allocation7 [shape = 'u8[49152]{0}', space=vmem, size = 0xc000, scoped, tag = 'output window, operand 0, single buffered']
    #allocation8 [shape = 's32[2]{0}', space=sflag, size = 0x8, scoped, tag = 'scoped memory for tpu_custom_call.1']
    %11 = vsyncpa [#allocation8], 0
    loop: start=0, step=1, limit=5
    $region2: #{tpu_custom_call.1} parent=1 // loop_pre_header
      _
    $region3: #{tpu_custom_call.1} parent=1 // loop_header
      %s13 = sphi 0, %s17
      %p14 = scmp.ge.s32.totalorder %s13, 5
      %s27 = sphi 0, %s29
      %s30 = sphi 0, %s27
      %s31 = sphi 0, %s30
      %s47 = sphi 0, %s31
      %s51 = sphi 0, %s51
      %s53 = sphi 0, %s51
      %s54 = sphi 0, %s53
      %s68 = sphi 0, %s54
      %s72 = sphi 0, %s72
      %s74 = sphi 0, %s72
      %s75 = sphi 0, %s74
      %s89 = sphi 0, %s75
      %s93 = sphi 0, %s93
      %s95 = sphi 0, %s93
      %s96 = sphi 0, %s95
      %s110 = sphi 0, %s96
      %s114 = sphi 0, %s114
      %s116 = sphi 0, %s114
      %s117 = sphi 0, %s116
      %s131 = sphi 0, %s117
      %s135 = sphi 0, %s135
      %s137 = sphi 0, %s135
      %s138 = sphi 0, %s137
      %s152 = sphi 0, %s138
      %s156 = sphi 0, %s156
      %s158 = sphi 0, %s156
      %s159 = sphi 0, %s158
      %s173 = sphi 0, %s159
    $region4: #{tpu_custom_call.1} parent=1 // loop_header_branch
      %16 = sbr.rel (%p14) target = $region8
    $region5: #{tpu_custom_call.1} parent=1 // loop_body
      %s18 = ssub.s32 %s13, 1
      %s19 = ssub.s32 %s13, 2
      %s20 = sadd.s32 %s13, 1
      %p21 = scmp.lt.s32.totalorder %s13, 0
      %s22 = scalar_select %p21, %s13, 0
      %p23 = scmp.lt.s32.totalorder %s20, 0
      %s24 = scalar_select %p23, %s20, 0
      %s25 = ssub.s32 %s22, %s24
      %p26 = scmp.eq.s32.totalorder %s25, 0
      %s28 = sadd.s32 %s27, 1
      %s29 = scalar_select %p26, %s27, %s28
      %p32 = pneg %p26
      %p33 = scmp.eq.s32.totalorder %s13, 2
      %p34 = por %p32, %p33
      %p35 = scmp.ne.s32.totalorder %s27, %s30
      %p36 = scmp.eq.s32.totalorder %s13, 0
      %p37 = por %p35, %p36
      %p38 = scmp.ne.s32.totalorder %s27, %s30
      %p39 = scmp.eq.s32.totalorder %s18, 2
      %p40 = por %p38, %p39
      %p41 = scmp.ne.s32.totalorder %s30, %s31
      %p42 = scmp.eq.s32.totalorder %s18, 0
      %p43 = por %p41, %p42
      %p44 = scmp.ne.s32.totalorder %s30, %s31
      %p45 = scmp.eq.s32.totalorder %s19, 2
      %p46 = por %p44, %p45
      %p48 = scmp.ne.s32.totalorder %s31, %s47
      %p49 = scmp.eq.s32.totalorder %s19, 0
      %p50 = por %p48, %p49
      %s52 = sadd.s32 %s51, 1
      %p55 = scmp.eq.s32.totalorder %s13, 2
      %p56 = scmp.ne.s32.totalorder %s51, %s53
      %p57 = scmp.eq.s32.totalorder %s13, 0
      %p58 = por %p56, %p57
      %p59 = scmp.ne.s32.totalorder %s51, %s53
      %p60 = scmp.eq.s32.totalorder %s18, 2
      %p61 = por %p59, %p60
      %p62 = scmp.ne.s32.totalorder %s53, %s54
      %p63 = scmp.eq.s32.totalorder %s18, 0
      %p64 = por %p62, %p63
      %p65 = scmp.ne.s32.totalorder %s53, %s54
      %p66 = scmp.eq.s32.totalorder %s19, 2
      %p67 = por %p65, %p66
      %p69 = scmp.ne.s32.totalorder %s54, %s68
      %p70 = scmp.eq.s32.totalorder %s19, 0
      %p71 = por %p69, %p70
      %s73 = sadd.s32 %s72, 1
      %p76 = scmp.eq.s32.totalorder %s13, 2
      %p77 = scmp.ne.s32.totalorder %s72, %s74
      %p78 = scmp.eq.s32.totalorder %s13, 0
      %p79 = por %p77, %p78
      %p80 = scmp.ne.s32.totalorder %s72, %s74
      %p81 = scmp.eq.s32.totalorder %s18, 2
      %p82 = por %p80, %p81
      %p83 = scmp.ne.s32.totalorder %s74, %s75
      %p84 = scmp.eq.s32.totalorder %s18, 0
      %p85 = por %p83, %p84
      %p86 = scmp.ne.s32.totalorder %s74, %s75
      %p87 = scmp.eq.s32.totalorder %s19, 2
      %p88 = por %p86, %p87
      %p90 = scmp.ne.s32.totalorder %s75, %s89
      %p91 = scmp.eq.s32.totalorder %s19, 0
      %p92 = por %p90, %p91
      %s94 = sadd.s32 %s93, 1
      %p97 = scmp.eq.s32.totalorder %s13, 2
      %p98 = scmp.ne.s32.totalorder %s93, %s95
      %p99 = scmp.eq.s32.totalorder %s13, 0
      %p100 = por %p98, %p99
      %p101 = scmp.ne.s32.totalorder %s93, %s95
      %p102 = scmp.eq.s32.totalorder %s18, 2
      %p103 = por %p101, %p102
      %p104 = scmp.ne.s32.totalorder %s95, %s96
      %p105 = scmp.eq.s32.totalorder %s18, 0
      %p106 = por %p104, %p105
      %p107 = scmp.ne.s32.totalorder %s95, %s96
      %p108 = scmp.eq.s32.totalorder %s19, 2
      %p109 = por %p107, %p108
      %p111 = scmp.ne.s32.totalorder %s96, %s110
      %p112 = scmp.eq.s32.totalorder %s19, 0
      %p113 = por %p111, %p112
      %s115 = sadd.s32 %s114, 1
      %p118 = scmp.eq.s32.totalorder %s13, 2
      %p119 = scmp.ne.s32.totalorder %s114, %s116
      %p120 = scmp.eq.s32.totalorder %s13, 0
      %p121 = por %p119, %p120
      %p122 = scmp.ne.s32.totalorder %s114, %s116
      %p123 = scmp.eq.s32.totalorder %s18, 2
      %p124 = por %p122, %p123
      %p125 = scmp.ne.s32.totalorder %s116, %s117
      %p126 = scmp.eq.s32.totalorder %s18, 0
      %p127 = por %p125, %p126
      %p128 = scmp.ne.s32.totalorder %s116, %s117
      %p129 = scmp.eq.s32.totalorder %s19, 2
      %p130 = por %p128, %p129
      %p132 = scmp.ne.s32.totalorder %s117, %s131
      %p133 = scmp.eq.s32.totalorder %s19, 0
      %p134 = por %p132, %p133
      %s136 = sadd.s32 %s135, 1
      %p139 = scmp.eq.s32.totalorder %s13, 2
      %p140 = scmp.ne.s32.totalorder %s135, %s137
      %p141 = scmp.eq.s32.totalorder %s13, 0
      %p142 = por %p140, %p141
      %p143 = scmp.ne.s32.totalorder %s135, %s137
      %p144 = scmp.eq.s32.totalorder %s18, 2
      %p145 = por %p143, %p144
      %p146 = scmp.ne.s32.totalorder %s137, %s138
      %p147 = scmp.eq.s32.totalorder %s18, 0
      %p148 = por %p146, %p147
      %p149 = scmp.ne.s32.totalorder %s137, %s138
      %p150 = scmp.eq.s32.totalorder %s19, 2
      %p151 = por %p149, %p150
      %p153 = scmp.ne.s32.totalorder %s138, %s152
      %p154 = scmp.eq.s32.totalorder %s19, 0
      %p155 = por %p153, %p154
      %s157 = sadd.s32 %s156, 1
      %p160 = scmp.eq.s32.totalorder %s13, 2
      %p161 = scmp.ne.s32.totalorder %s156, %s158
      %p162 = scmp.eq.s32.totalorder %s13, 0
      %p163 = por %p161, %p162
      %p164 = scmp.ne.s32.totalorder %s156, %s158
      %p165 = scmp.eq.s32.totalorder %s18, 2
      %p166 = por %p164, %p165
      %p167 = scmp.ne.s32.totalorder %s158, %s159
      %p168 = scmp.eq.s32.totalorder %s18, 0
      %p169 = por %p167, %p168
      %p170 = scmp.ne.s32.totalorder %s158, %s159
      %p171 = scmp.eq.s32.totalorder %s19, 2
      %p172 = por %p170, %p171
      %p174 = scmp.ne.s32.totalorder %s159, %s173
      %p175 = scmp.eq.s32.totalorder %s19, 0
      %p176 = por %p174, %p175
      %p177 = scmp.le.s32.totalorder 1, %s13
      %p178 = scmp.lt.s32.totalorder %s13, 4
      %p179 = pnand %p177, %p178
      %p180 = pneg %p179
      // Predicated region
      $region9: #{tpu_custom_call.1} parent=5 // pred_check
        _
      $region10: #{tpu_custom_call.1} parent=5 // pred_check_branch
        %182 = sbr.rel (%p179) target = $region12
      $region11: #{tpu_custom_call.1} parent=5 // pred_region
        %s183 = ssub.s32 %s13, 1
        // Predicated region
        $region13: #{tpu_custom_call.1} parent=11 // pred_check
          %p184 = pneg %p64
        $region14: #{tpu_custom_call.1} parent=11 // pred_check_branch
          %186 = sbr.rel (%p184) target = $region16
        $region15: #{tpu_custom_call.1} parent=11 // pred_region
          _
        $region16: #{tpu_custom_call.1} parent=11 // pred_fallthru
          _
        // Predicated region
        $region17: #{tpu_custom_call.1} parent=11 // pred_check
          %p187 = pneg %p85
        $region18: #{tpu_custom_call.1} parent=11 // pred_check_branch
          %189 = sbr.rel (%p187) target = $region20
        $region19: #{tpu_custom_call.1} parent=11 // pred_region
          _
        $region20: #{tpu_custom_call.1} parent=11 // pred_fallthru
          _
        // Predicated region
        $region21: #{tpu_custom_call.1} parent=11 // pred_check
          %p190 = pneg %p106
        $region22: #{tpu_custom_call.1} parent=11 // pred_check_branch
          %192 = sbr.rel (%p190) target = $region24
        $region23: #{tpu_custom_call.1} parent=11 // pred_region
          _
        $region24: #{tpu_custom_call.1} parent=11 // pred_fallthru
          _
        // Predicated region
        $region25: #{tpu_custom_call.1} parent=11 // pred_check
          %p193 = pneg %p127
        $region26: #{tpu_custom_call.1} parent=11 // pred_check_branch
          %195 = sbr.rel (%p193) target = $region28
        $region27: #{tpu_custom_call.1} parent=11 // pred_region
          _
        $region28: #{tpu_custom_call.1} parent=11 // pred_fallthru
          _
        // Predicated region
        $region29: #{tpu_custom_call.1} parent=11 // pred_check
          %p196 = pneg %p148
        $region30: #{tpu_custom_call.1} parent=11 // pred_check_branch
          %198 = sbr.rel (%p196) target = $region32
        $region31: #{tpu_custom_call.1} parent=11 // pred_region
          _
        $region32: #{tpu_custom_call.1} parent=11 // pred_fallthru
          _
      $region12: #{tpu_custom_call.1} parent=5 // pred_fallthru
        _
      %p199 = scmp.lt.s32.totalorder %s13, 3
      // Predicated region
      $region33: #{tpu_custom_call.1} parent=5 // pred_check
        %p200 = pneg %p199
      $region34: #{tpu_custom_call.1} parent=5 // pred_check_branch
        %202 = sbr.rel (%p200) target = $region36
      $region35: #{tpu_custom_call.1} parent=5 // pred_region
        // Predicated region
        $region37: #{tpu_custom_call.1} parent=35 // pred_check
          %p203 = pneg %p37
        $region38: #{tpu_custom_call.1} parent=35 // pred_check_branch
          %205 = sbr.rel (%p203) target = $region40
        $region39: #{tpu_custom_call.1} parent=35 // pred_region
          %p206 = scmp.lt.s32.totalorder %s13, 0
          %s207 = scalar_select %p206, %s13, 0
          %s208 = smul.u32 4, %s207
          %p209 = scmp.lt.s32.totalorder %s208, 3
          %s210 = scalar_select %p209, %s208, 3
          %s211 = smul.addr %s210, 8
          %s212 = scalar_lea.vmem %s0, %s211
          %p213 = scmp.lt.s32.totalorder %s13, 0
          %s214 = scalar_select %p213, %s13, 0
          %s215 = smul.u32 4, %s214
        $region40: #{tpu_custom_call.1} parent=35 // pred_fallthru
          _
      $region36: #{tpu_custom_call.1} parent=5 // pred_fallthru
        _
      %p216 = scmp.le.s32.totalorder 1, %s13
      %p217 = scmp.lt.s32.totalorder %s13, 4
      %p218 = pnand %p216, %p217
      %p219 = pneg %p218
      // Predicated region
      $region41: #{tpu_custom_call.1} parent=5 // pred_check
        _
      $region42: #{tpu_custom_call.1} parent=5 // pred_check_branch
        %221 = sbr.rel (%p218) target = $region44
      $region43: #{tpu_custom_call.1} parent=5 // pred_region
        %s222 = ssub.s32 %s13, 1
        %p223 = scmp.lt.s32.totalorder %s18, 0
        %s224 = scalar_select %p223, %s18, 0
        %s225 = smul.u32 4, %s224
        %p226 = scmp.lt.s32.totalorder %s225, 3
        %s227 = scalar_select %p226, %s225, 3
        %s228 = smul.addr %s227, 8
        %s229 = scalar_lea.vmem %s0, %s228
        %p230 = pneg %p43
        %p231 = pneg %p40
        %p232 = pneg %p64
        %p233 = pneg %p61
        %p234 = pneg %p85
        %p235 = pneg %p82
        %p236 = pneg %p106
        %p237 = pneg %p103
        %p238 = pneg %p127
        %p239 = pneg %p124
        %p240 = pneg %p148
        %p241 = pneg %p145
        %p242 = pneg %p169
        %p243 = pneg %p166
        %p244 = scmp.lt.s32.totalorder %s18, 0
        %s245 = scalar_select %p244, %s18, 0
        %s246 = smul.u32 4, %s245
        %p247 = scmp.lt.s32.totalorder %s246, 3
        %s248 = scalar_select %p247, %s246, 3
        %s249 = smul.addr %s248, 8
        %s250 = scalar_lea.vmem %s0, %s249
        %p251 = scmp.lt.s32.totalorder %s18, 0
        %s252 = scalar_select %p251, %s18, 0
        %s253 = smul.u32 4, %s252
        %p256 = scmp.eq.s32.totalorder %s18, 0
        // Predicated region
        $region45: #{tpu_custom_call.1} parent=43 // pred_check
          %p257 = pneg %p256
        $region46: #{tpu_custom_call.1} parent=43 // pred_check_branch
          %259 = sbr.rel (%p257) target = $region48
        $region47: #{tpu_custom_call.1} parent=43 // pred_region
          %260 = vst [vmem:[#allocation3] sm:$0x1] 0.0
          %v261 = vld [vmem:[%s2] sm:$0xf]
          %v262 = vld [vmem:[%s2 + $0x4] sm:$0xf]
          %v263 = vld [vmem:[%s2 + $0x8] sm:$0xf]
          %v264 = vld [vmem:[%s2 + $0xc] sm:$0xf]
          %v265 = vld [vmem:[%s1] sm:$0xf]
          %v266 = vld [vmem:[%s1 + $0x4] sm:$0xf]
          %v267 = vld [vmem:[%s1 + $0x8] sm:$0xf]
          %v268 = vld [vmem:[%s1 + $0xc] sm:$0xf]
          %v269 = vld [vmem:[%s3] sm:$0xff]
          %v270 = vld [vmem:[%s3 + $0x8] sm:$0xff]
          %v271 = vld [vmem:[%s3 + $0x10] sm:$0xff]
          %v272 = vld [vmem:[%s3 + $0x18] sm:$0xff]
          %274 = vset.pattern.permute.xlu0 0
          %275 = vperm.xlu0 %274, %v269
          %v276 = vpop.permute.xlu0 %275
          %279 = vset.pattern.permute.xlu0 0
          %280 = vperm.xlu0 %279, %v270
          %v281 = vpop.permute.xlu0 %280
          %284 = vset.pattern.permute.xlu0 0
          %285 = vperm.xlu0 %284, %v271
          %v286 = vpop.permute.xlu0 %285
          %289 = vset.pattern.permute.xlu0 0
          %290 = vperm.xlu0 %289, %v272
          %v291 = vpop.permute.xlu0 %290
          %v297 = vunpack.c.l.b16 %v261
          %v298 = vunpack.c.l.b16 %v262
          %v299 = vunpack.c.l.b16 %v263
          %v300 = vunpack.c.l.b16 %v264
          %v301 = vpack.c.b16 %v298, %v297
          %v302 = vpack.c.b16 %v300, %v299
          %v307 = vunpack.c.l.b16 %v265
          %v308 = vunpack.c.l.b16 %v266
          %v309 = vunpack.c.l.b16 %v267
          %v310 = vunpack.c.l.b16 %v268
          %v311 = vpack.c.b16 %v308, %v307
          %v312 = vpack.c.b16 %v310, %v309
          %vm315 = vcmask 261120
          %v317 = vsel %vm315, %v301, 0
          %v320 = vsel %vm315, %v302, 0
          %322 = vmatprep.subr.bf16.mxu0 0
          %323 = vmatpush1.bf16.msra.mxu0 %v311
          %324 = vmatprep.subr.bf16.mxu0 0
          %325 = vmatpush1.bf16.msra.mxu0 %v312
          %326 = vmatprep.subr.bf16.mxu0 0
          %327 = vmatpush1.bf16.msra.mxu0 0
          %328 = vmatprep.subr.bf16.mxu0 0
          %329 = vmatpush1.bf16.msra.mxu0 0
          %330 = vmatprep.subr.bf16.mxu0 0
          %331 = vmatpush1.bf16.msra.mxu0 0
          %332 = vmatprep.subr.bf16.mxu0 0
          %333 = vmatpush1.bf16.msra.mxu0 0
          %334 = vmatprep.subr.bf16.mxu0 0
          %335 = vmatpush1.bf16.msra.mxu0 0
          %336 = vmatprep.subr.bf16.mxu0 0
          %337 = vmatpush1.bf16.msra.mxu0 0
          %338 = vmatprep.subr.bf16.mxu0 0
          %339 = vmatpush1.bf16.msra.mxu0 0
          %340 = vmatprep.subr.bf16.mxu0 0
          %341 = vmatpush1.bf16.msra.mxu0 0
          %342 = vmatprep.subr.bf16.mxu0 0
          %343 = vmatpush1.bf16.msra.mxu0 0
          %344 = vmatprep.subr.bf16.mxu0 0
          %345 = vmatpush1.bf16.msra.mxu0 0
          %346 = vmatprep.subr.bf16.mxu0 0
          %347 = vmatpush1.bf16.msra.mxu0 0
          %348 = vmatprep.subr.bf16.mxu0 0
          %349 = vmatpush1.bf16.msra.mxu0 0
          %350 = vmatprep.subr.bf16.mxu0 0
          %351 = vmatpush1.bf16.msra.mxu0 0
          %352 = vmatprep.subr.bf16.mxu0 0
          %353 = vmatpush1.bf16.msra.mxu0 0
          %354 = vmatprep.mubr.bf16.mxu0 0
          %355 = vmatmul.mubr.bf16.gmra.mrb[0].mxu0 %v317
          %v356 = vpop.f32.mrb[0].mxu0
          %v357 = vadd.f32 %v276, %v356
          %v358 = vpop.f32.mrb[0].mxu0
          %v359 = vpop.f32.mrb[0].mxu0
          %v360 = vadd.f32 %v281, %v359
          %v361 = vpop.f32.mrb[0].mxu0
          %362 = vmatprep.mubr.bf16.mxu0 0
          %363 = vmatmul.mubr.bf16.gmra.mrb[0].mxu0 %v320
          %v364 = vpop.f32.mrb[0].mxu0
          %v365 = vadd.f32 %v286, %v364
          %v366 = vpop.f32.mrb[0].mxu0
          %v367 = vpop.f32.mrb[0].mxu0
          %v368 = vadd.f32 %v291, %v367
          %v369 = vpop.f32.mrb[0].mxu0
          %370 = vdwg.mxu0
          %v371 = vmax.f32 %v357, 0.0
          %v372 = vmax.f32 %v360, 0.0
          %v373 = vmax.f32 %v365, 0.0
          %v374 = vmax.f32 %v368, 0.0
          %v375 = vld [vmem:[%s4] sm:$0xf]
          %v376 = vld [vmem:[%s4 + $0x4] sm:$0xf]
          %v377 = vld [vmem:[%s4 + $0x8] sm:$0xf]
          %v378 = vld [vmem:[%s4 + $0xc] sm:$0xf]
          %v379 = vpack.c.bf16 %v372, %v371
          %v380 = vpack.c.bf16 %v374, %v373
          %v381 = vld [vmem:[%s5] sm:$0xff]
          %v382 = vld [vmem:[%s5 + $0x8] sm:$0xff]
          %v383 = vld [vmem:[%s5 + $0x10] sm:$0xff]
          %v384 = vld [vmem:[%s5 + $0x18] sm:$0xff]
          %386 = vset.pattern.permute.xlu0 0
          %387 = vperm.xlu0 %386, %v381
          %v388 = vpop.permute.xlu0 %387
          %391 = vset.pattern.permute.xlu0 0
          %392 = vperm.xlu0 %391, %v382
          %v393 = vpop.permute.xlu0 %392
          %396 = vset.pattern.permute.xlu0 0
          %397 = vperm.xlu0 %396, %v383
          %v398 = vpop.permute.xlu0 %397
          %401 = vset.pattern.permute.xlu0 0
          %402 = vperm.xlu0 %401, %v384
          %v403 = vpop.permute.xlu0 %402
          %v409 = vunpack.c.l.b16 %v375
          %v410 = vunpack.c.l.b16 %v376
          %v411 = vunpack.c.l.b16 %v377
          %v412 = vunpack.c.l.b16 %v378
          %v413 = vpack.c.b16 %v410, %v409
          %v414 = vpack.c.b16 %v412, %v411
          %v416 = vsel %vm315, %v413, 0
          %v419 = vsel %vm315, %v414, 0
          %421 = vmatprep.subr.bf16.mxu0 0
          %422 = vmatpush1.bf16.msra.mxu0 %v379
          %423 = vmatprep.subr.bf16.mxu0 0
          %424 = vmatpush1.bf16.msra.mxu0 %v380
          %425 = vmatprep.subr.bf16.mxu0 0
          %426 = vmatpush1.bf16.msra.mxu0 0
          %427 = vmatprep.subr.bf16.mxu0 0
          %428 = vmatpush1.bf16.msra.mxu0 0
          %429 = vmatprep.subr.bf16.mxu0 0
          %430 = vmatpush1.bf16.msra.mxu0 0
          %431 = vmatprep.subr.bf16.mxu0 0
          %432 = vmatpush1.bf16.msra.mxu0 0
          %433 = vmatprep.subr.bf16.mxu0 0
          %434 = vmatpush1.bf16.msra.mxu0 0
          %435 = vmatprep.subr.bf16.mxu0 0
          %436 = vmatpush1.bf16.msra.mxu0 0
          %437 = vmatprep.subr.bf16.mxu0 0
          %438 = vmatpush1.bf16.msra.mxu0 0
          %439 = vmatprep.subr.bf16.mxu0 0
          %440 = vmatpush1.bf16.msra.mxu0 0
          %441 = vmatprep.subr.bf16.mxu0 0
          %442 = vmatpush1.bf16.msra.mxu0 0
          %443 = vmatprep.subr.bf16.mxu0 0
          %444 = vmatpush1.bf16.msra.mxu0 0
          %445 = vmatprep.subr.bf16.mxu0 0
          %446 = vmatpush1.bf16.msra.mxu0 0
          %447 = vmatprep.subr.bf16.mxu0 0
          %448 = vmatpush1.bf16.msra.mxu0 0
          %449 = vmatprep.subr.bf16.mxu0 0
          %450 = vmatpush1.bf16.msra.mxu0 0
          %451 = vmatprep.subr.bf16.mxu0 0
          %452 = vmatpush1.bf16.msra.mxu0 0
          %453 = vmatprep.mubr.bf16.mxu0 0
          %454 = vmatmul.mubr.bf16.gmra.mrb[0].mxu0 %v416
          %v455 = vpop.f32.mrb[0].mxu0
          %v456 = vadd.f32 %v388, %v455
          %v457 = vpop.f32.mrb[0].mxu0
          %v458 = vpop.f32.mrb[0].mxu0
          %v459 = vadd.f32 %v393, %v458
          %v460 = vpop.f32.mrb[0].mxu0
          %461 = vmatprep.mubr.bf16.mxu0 0
          %462 = vmatmul.mubr.bf16.gmra.mrb[0].mxu0 %v419
          %v463 = vpop.f32.mrb[0].mxu0
          %v464 = vadd.f32 %v398, %v463
          %v465 = vpop.f32.mrb[0].mxu0
          %v466 = vpop.f32.mrb[0].mxu0
          %v467 = vadd.f32 %v403, %v466
          %v468 = vpop.f32.mrb[0].mxu0
          %469 = vdwg.mxu0
          %v470 = vmax.f32 %v456, 0.0
          %v471 = vmax.f32 %v459, 0.0
          %v472 = vmax.f32 %v464, 0.0
          %v473 = vmax.f32 %v467, 0.0
          %474 = vst [vmem:[#allocation5] sm:$0xff] %v470
          %475 = vst [vmem:[#allocation5 + $0x8] sm:$0xff] %v471
          %476 = vst [vmem:[#allocation5 + $0x10] sm:$0xff] %v472
          %477 = vst [vmem:[#allocation5 + $0x18] sm:$0xff] %v473
        $region48: #{tpu_custom_call.1} parent=43 // pred_fallthru
          _
        %p478 = scmp.lt.s32.totalorder %s18, 1
        // Predicated region
        $region49: #{tpu_custom_call.1} parent=43 // pred_check
          %p479 = pneg %p478
        $region50: #{tpu_custom_call.1} parent=43 // pred_check_branch
          %481 = sbr.rel (%p479) target = $region52
        $region51: #{tpu_custom_call.1} parent=43 // pred_region
          %v482 = vld [vmem:[%s250] sm:$0xff]
          %v483 = vld [vmem:[%s250 + $0x8] sm:$0xff]
          %v484 = vld [vmem:[%s250 + $0x10] sm:$0xff]
          %v485 = vld [vmem:[%s250 + $0x18] sm:$0xff]
          %v486 = vunpack.c.l.s8.bf16 %v482
          %v487 = vunpack.c.h.s8.bf16 %v482
          %v488 = vunpack.c.l.s8.bf16 %v483
          %v489 = vunpack.c.h.s8.bf16 %v483
          %v490 = vunpack.c.l.s8.bf16 %v484
          %v491 = vunpack.c.h.s8.bf16 %v484
          %v492 = vunpack.c.l.s8.bf16 %v485
          %v493 = vunpack.c.h.s8.bf16 %v485
          %s494 = smul.u32 %s18, 128
          %s495 = sshra.s32 %s494, 4
          %s496 = sand.u32 %s494, 15
          %s497 = smul.addr %s495, 8
          %s498 = scalar_lea.vmem [#allocation2], %s497
          %499 = vst [vmem:[%s498] sm:$0xff] %v486
          %500 = vst [vmem:[%s498 + $0x8] sm:$0xff] %v487
          %501 = vst [vmem:[%s498 + $0x10] sm:$0xff] %v488
          %502 = vst [vmem:[%s498 + $0x18] sm:$0xff] %v489
          %503 = vst [vmem:[%s498 + $0x20] sm:$0xff] %v490
          %504 = vst [vmem:[%s498 + $0x28] sm:$0xff] %v491
          %505 = vst [vmem:[%s498 + $0x30] sm:$0xff] %v492
          %506 = vst [vmem:[%s498 + $0x38] sm:$0xff] %v493
          %507 = vmatprep.subr.bf16.mxu0 0
          %508 = vmatpush1.bf16.msra.mxu0 %v486
          %509 = vmatprep.subr.bf16.mxu0 0
          %510 = vmatpush1.bf16.msra.mxu0 %v487
          %511 = vmatprep.subr.bf16.mxu0 0
          %512 = vmatpush1.bf16.msra.mxu0 %v488
          %513 = vmatprep.subr.bf16.mxu0 0
          %514 = vmatpush1.bf16.msra.mxu0 %v489
          %515 = vmatprep.subr.bf16.mxu0 0
          %516 = vmatpush1.bf16.msra.mxu0 %v490
          %517 = vmatprep.subr.bf16.mxu0 0
          %518 = vmatpush1.bf16.msra.mxu0 %v491
          %519 = vmatprep.subr.bf16.mxu0 0
          %520 = vmatpush1.bf16.msra.mxu0 %v492
          %521 = vmatprep.subr.bf16.mxu0 0
          %522 = vmatpush1.bf16.msra.mxu0 %v493
          %523 = vmatprep.subr.bf16.mxu0 0
          %524 = vmatpush1.bf16.msra.mxu0 0
          %525 = vmatprep.subr.bf16.mxu0 0
          %526 = vmatpush1.bf16.msra.mxu0 0
          %527 = vmatprep.subr.bf16.mxu0 0
          %528 = vmatpush1.bf16.msra.mxu0 0
          %529 = vmatprep.subr.bf16.mxu0 0
          %530 = vmatpush1.bf16.msra.mxu0 0
          %531 = vmatprep.subr.bf16.mxu0 0
          %532 = vmatpush1.bf16.msra.mxu0 0
          %533 = vmatprep.subr.bf16.mxu0 0
          %534 = vmatpush1.bf16.msra.mxu0 0
          %535 = vmatprep.subr.bf16.mxu0 0
          %536 = vmatpush1.bf16.msra.mxu0 0
          %537 = vmatprep.subr.bf16.mxu0 0
          %538 = vmatpush1.bf16.msra.mxu0 0
          %539 = vmatprep.mubr.bf16.mxu0 0
          %540 = vmatmul.mubr.bf16.gmra.mrb[0].mxu0 1065369472
          %v541 = vpop.f32.mrb[0].mxu0
          %v542 = vadd.f32 0.0, %v541
          %v543 = vpop.f32.mrb[0].mxu0
          %v544 = vpop.f32.mrb[0].mxu0
          %v545 = vpop.f32.mrb[0].mxu0
          %546 = vdwg.mxu0
          %v547 = vld [vmem:[#allocation3] sm:$0x1]
          %v548 = vadd.f32 %v547, %v542
          %549 = vst [vmem:[#allocation3] sm:$0x1] %v548
        $region52: #{tpu_custom_call.1} parent=43 // pred_fallthru
          _
        %p550 = scmp.eq.s32.totalorder %s18, 1
        // Predicated region
        $region53: #{tpu_custom_call.1} parent=43 // pred_check
          %p551 = pneg %p550
        $region54: #{tpu_custom_call.1} parent=43 // pred_check_branch
          %553 = sbr.rel (%p551) target = $region56
        $region55: #{tpu_custom_call.1} parent=43 // pred_region
          %v554 = vld [vmem:[#allocation3] sm:$0x1]
          %v555 = vmax.f32 %v554, 1.0
          %v556 = vrsqrt.pop %v555
          %557 = vst [vmem:[#allocation4] sm:$0x1] %v556
          %v558 = vld [vmem:[#allocation5] sm:$0xff]
          %v559 = vld [vmem:[#allocation5 + $0x8] sm:$0xff]
          %v560 = vld [vmem:[#allocation5 + $0x10] sm:$0xff]
          %v561 = vld [vmem:[#allocation5 + $0x18] sm:$0xff]
          %562 = vst [vmem:[#allocation6] sm:$0xff] %v558
          %563 = vst [vmem:[#allocation6 + $0x8] sm:$0xff] %v559
          %564 = vst [vmem:[#allocation6 + $0x10] sm:$0xff] %v560
          %565 = vst [vmem:[#allocation6 + $0x18] sm:$0xff] %v561
          %v566 = vmul.f32 %v558, 3.0
          %v567 = vmul.f32 %v559, 3.0
          %v568 = vmul.f32 %v560, 3.0
          %v569 = vmul.f32 %v561, 3.0
          %570 = vst [vmem:[#allocation7] sm:$0xff] %v566
          %571 = vst [vmem:[#allocation7 + $0x8] sm:$0xff] %v567
          %572 = vst [vmem:[#allocation7 + $0x10] sm:$0xff] %v568
          %573 = vst [vmem:[#allocation7 + $0x18] sm:$0xff] %v569
          %v574 = vmul.f32 %v558, 0.0
          %v575 = vmul.f32 %v559, 0.0
          %v576 = vmul.f32 %v560, 0.0
          %v577 = vmul.f32 %v561, 0.0
          %578 = vst [vmem:[#allocation7 + $0x20] sm:$0xff] %v574
          %579 = vst [vmem:[#allocation7 + $0x28] sm:$0xff] %v575
          %580 = vst [vmem:[#allocation7 + $0x30] sm:$0xff] %v576
          %581 = vst [vmem:[#allocation7 + $0x38] sm:$0xff] %v577
          %582 = vst [vmem:[#allocation7 + $0x40] sm:$0xff] %v574
          %583 = vst [vmem:[#allocation7 + $0x48] sm:$0xff] %v575
          %584 = vst [vmem:[#allocation7 + $0x50] sm:$0xff] %v576
          %585 = vst [vmem:[#allocation7 + $0x58] sm:$0xff] %v577
        $region56: #{tpu_custom_call.1} parent=43 // pred_fallthru
          _
        %p586 = scmp.ge.s32.totalorder %s18, 1
        // Predicated region
        $region57: #{tpu_custom_call.1} parent=43 // pred_check
          %p587 = pneg %p586
        $region58: #{tpu_custom_call.1} parent=43 // pred_check_branch
          %589 = sbr.rel (%p587) target = $region60
        $region59: #{tpu_custom_call.1} parent=43 // pred_region
          %s590 = ssub.s32 %s18, 1
          %v591 = vld [vmem:[#allocation4] sm:$0x1]
          %v592 = vld [vmem:[#allocation6] sm:$0xff]
          %v593 = vld [vmem:[#allocation6 + $0x8] sm:$0xff]
          %v594 = vld [vmem:[#allocation6 + $0x10] sm:$0xff]
          %v595 = vld [vmem:[#allocation6 + $0x18] sm:$0xff]
          %v597 = vlaneseq
          %v598 = vshrl.u32 %v597, 7
          %v599 = vsub.s32 0, %v598
          %v600 = vrot.slane %v591, %v599
          %v602 = vmul.f32 %v592, %v600
          %v603 = vmul.f32 %v593, %v600
          %v604 = vmul.f32 %v594, %v600
          %v605 = vmul.f32 %v595, %v600
          %v606 = vpack.c.bf16 %v603, %v602
          %v607 = vpack.c.bf16 %v605, %v604
          %v608 = vld [vmem:[#allocation2] sm:$0xff]
          %v609 = vld [vmem:[#allocation2 + $0x8] sm:$0xff]
          %v610 = vld [vmem:[#allocation2 + $0x10] sm:$0xff]
          %v611 = vld [vmem:[#allocation2 + $0x18] sm:$0xff]
          %v612 = vld [vmem:[#allocation2 + $0x20] sm:$0xff]
          %v613 = vld [vmem:[#allocation2 + $0x28] sm:$0xff]
          %v614 = vld [vmem:[#allocation2 + $0x30] sm:$0xff]
          %v615 = vld [vmem:[#allocation2 + $0x38] sm:$0xff]
          %616 = vmatprep.subr.bf16.mxu0 0
          %617 = vmatpush1.bf16.msra.mxu0 %v608
          %618 = vmatprep.subr.bf16.mxu0 0
          %619 = vmatpush1.bf16.msra.mxu0 %v609
          %620 = vmatprep.subr.bf16.mxu0 0
          %621 = vmatpush1.bf16.msra.mxu0 %v610
          %622 = vmatprep.subr.bf16.mxu0 0
          %623 = vmatpush1.bf16.msra.mxu0 %v611
          %624 = vmatprep.subr.bf16.mxu0 0
          %625 = vmatpush1.bf16.msra.mxu0 %v612
          %626 = vmatprep.subr.bf16.mxu0 0
          %627 = vmatpush1.bf16.msra.mxu0 %v613
          %628 = vmatprep.subr.bf16.mxu0 0
          %629 = vmatpush1.bf16.msra.mxu0 %v614
          %630 = vmatprep.subr.bf16.mxu0 0
          %631 = vmatpush1.bf16.msra.mxu0 %v615
          %632 = vmatprep.subr.bf16.mxu0 0
          %633 = vmatpush1.bf16.msra.mxu0 0
          %634 = vmatprep.subr.bf16.mxu0 0
          %635 = vmatpush1.bf16.msra.mxu0 0
          %636 = vmatprep.subr.bf16.mxu0 0
          %637 = vmatpush1.bf16.msra.mxu0 0
          %638 = vmatprep.subr.bf16.mxu0 0
          %639 = vmatpush1.bf16.msra.mxu0 0
          %640 = vmatprep.subr.bf16.mxu0 0
          %641 = vmatpush1.bf16.msra.mxu0 0
          %642 = vmatprep.subr.bf16.mxu0 0
          %643 = vmatpush1.bf16.msra.mxu0 0
          %644 = vmatprep.subr.bf16.mxu0 0
          %645 = vmatpush1.bf16.msra.mxu0 0
          %646 = vmatprep.subr.bf16.mxu0 0
          %647 = vmatpush1.bf16.msra.mxu0 0
          %648 = vmatprep.mubr.bf16.mxu0 0
          %649 = vmatmul.mubr.bf16.gmra.mrb[0].mxu0 %v606
          %v650 = vpop.f32.mrb[0].mxu0
          %v651 = vadd.f32 0.0, %v650
          %v652 = vpop.f32.mrb[0].mxu0
          %v653 = vpop.f32.mrb[0].mxu0
          %v654 = vadd.f32 0.0, %v653
          %v655 = vpop.f32.mrb[0].mxu0
          %656 = vmatprep.mubr.bf16.mxu0 0
          %657 = vmatmul.mubr.bf16.gmra.mrb[0].mxu0 %v607
          %v658 = vpop.f32.mrb[0].mxu0
          %v659 = vadd.f32 0.0, %v658
          %v660 = vpop.f32.mrb[0].mxu0
          %v661 = vpop.f32.mrb[0].mxu0
          %v662 = vadd.f32 0.0, %v661
          %v663 = vpop.f32.mrb[0].mxu0
          %664 = vdwg.mxu0
          %v665 = vmul.f32 %v600, %v651
          %v666 = vmul.f32 %v600, %v654
          %v667 = vmul.f32 %v600, %v659
          %v668 = vmul.f32 %v600, %v662
          %v669 = vsub.f32 %v592, %v665
          %v670 = vsub.f32 %v593, %v666
          %v671 = vsub.f32 %v594, %v667
          %v672 = vsub.f32 %v595, %v668
          %673 = vst [vmem:[#allocation6] sm:$0xff] %v669
          %674 = vst [vmem:[#allocation6 + $0x8] sm:$0xff] %v670
          %675 = vst [vmem:[#allocation6 + $0x10] sm:$0xff] %v671
          %676 = vst [vmem:[#allocation6 + $0x18] sm:$0xff] %v672
          %p677 = scmp.eq.s32.totalorder %s590, 0
          %s678 = scalar_select %p677, -3.0, 0.0
          %p679 = scmp.eq.s32.totalorder %s590, 1
          %s680 = scalar_select %p679, 0.75, %s678
          %v681 = vld [vmem:[#allocation7] sm:$0xff]
          %v682 = vld [vmem:[#allocation7 + $0x8] sm:$0xff]
          %v683 = vld [vmem:[#allocation7 + $0x10] sm:$0xff]
          %v684 = vld [vmem:[#allocation7 + $0x18] sm:$0xff]
          %v685 = vstv %s680
          %v686 = vmul.f32 %v685, %v669
          %v687 = vmul.f32 %v685, %v670
          %v688 = vmul.f32 %v685, %v671
          %v689 = vmul.f32 %v685, %v672
          %v690 = vadd.f32 %v681, %v686
          %v691 = vadd.f32 %v682, %v687
          %v692 = vadd.f32 %v683, %v688
          %v693 = vadd.f32 %v684, %v689
          %694 = vst [vmem:[#allocation7] sm:$0xff] %v690
          %695 = vst [vmem:[#allocation7 + $0x8] sm:$0xff] %v691
          %696 = vst [vmem:[#allocation7 + $0x10] sm:$0xff] %v692
          %697 = vst [vmem:[#allocation7 + $0x18] sm:$0xff] %v693
          %s698 = scalar_select %p677, 3.0, 0.0
          %s699 = scalar_select %p679, -1.5, %s698
          %v700 = vld [vmem:[#allocation7 + $0x20] sm:$0xff]
          %v701 = vld [vmem:[#allocation7 + $0x28] sm:$0xff]
          %v702 = vld [vmem:[#allocation7 + $0x30] sm:$0xff]
          %v703 = vld [vmem:[#allocation7 + $0x38] sm:$0xff]
          %v704 = vstv %s699
          %v705 = vmul.f32 %v704, %v669
          %v706 = vmul.f32 %v704, %v670
          %v707 = vmul.f32 %v704, %v671
          %v708 = vmul.f32 %v704, %v672
          %v709 = vadd.f32 %v700, %v705
          %v710 = vadd.f32 %v701, %v706
          %v711 = vadd.f32 %v702, %v707
          %v712 = vadd.f32 %v703, %v708
          %713 = vst [vmem:[#allocation7 + $0x20] sm:$0xff] %v709
          %714 = vst [vmem:[#allocation7 + $0x28] sm:$0xff] %v710
          %715 = vst [vmem:[#allocation7 + $0x30] sm:$0xff] %v711
          %716 = vst [vmem:[#allocation7 + $0x38] sm:$0xff] %v712
          %s717 = scalar_select %p679, 0.75, 0.0
          %v718 = vld [vmem:[#allocation7 + $0x40] sm:$0xff]
          %v719 = vld [vmem:[#allocation7 + $0x48] sm:$0xff]
          %v720 = vld [vmem:[#allocation7 + $0x50] sm:$0xff]
          %v721 = vld [vmem:[#allocation7 + $0x58] sm:$0xff]
          %v722 = vstv %s717
          %v723 = vmul.f32 %v722, %v669
          %v724 = vmul.f32 %v722, %v670
          %v725 = vmul.f32 %v722, %v671
          %v726 = vmul.f32 %v722, %v672
          %v727 = vadd.f32 %v718, %v723
          %v728 = vadd.f32 %v719, %v724
          %v729 = vadd.f32 %v720, %v725
          %v730 = vadd.f32 %v721, %v726
          %731 = vst [vmem:[#allocation7 + $0x40] sm:$0xff] %v727
          %732 = vst [vmem:[#allocation7 + $0x48] sm:$0xff] %v728
          %733 = vst [vmem:[#allocation7 + $0x50] sm:$0xff] %v729
          %734 = vst [vmem:[#allocation7 + $0x58] sm:$0xff] %v730
        $region60: #{tpu_custom_call.1} parent=43 // pred_fallthru
          _
        // Predicated region
        $region61: #{tpu_custom_call.1} parent=43 // pred_check
          %p735 = pneg %p166
        $region62: #{tpu_custom_call.1} parent=43 // pred_check_branch
          %737 = sbr.rel (%p735) target = $region64
        $region63: #{tpu_custom_call.1} parent=43 // pred_region
          %s739 = ssub.s32 1536, 1536
          %740 = vsyncadd [#allocation8], %s739
          %s741 = sshll.u32 [#allocation7], 4
          %s742 = int_to_ptr.vmem [resolvable:$true] %s741
          %747 = dma.vmem_to_hbm [thread:$0]  %s742, 1536, %s6, [#allocation8], 128, 128, 8
        $region64: #{tpu_custom_call.1} parent=43 // pred_fallthru
          _
        // Predicated region
        $region65: #{tpu_custom_call.1} parent=43 // pred_check
          %p748 = pneg %p166
        $region66: #{tpu_custom_call.1} parent=43 // pred_check_branch
          %750 = sbr.rel (%p748) target = $region68
        $region67: #{tpu_custom_call.1} parent=43 // pred_region
          %751 = dma.done [#allocation8], 1536
        $region68: #{tpu_custom_call.1} parent=43 // pred_fallthru
          _
      $region44: #{tpu_custom_call.1} parent=5 // pred_fallthru
        _
      %p752 = scmp.le.s32.totalorder 2, %s13
      // Predicated region
      $region69: #{tpu_custom_call.1} parent=5 // pred_check
        %p753 = pneg %p752
      $region70: #{tpu_custom_call.1} parent=5 // pred_check_branch
        %755 = sbr.rel (%p753) target = $region72
      $region71: #{tpu_custom_call.1} parent=5 // pred_region
        %s756 = ssub.s32 %s13, 2
      $region72: #{tpu_custom_call.1} parent=5 // pred_fallthru
        _
    $region6: #{tpu_custom_call.1} parent=1 // loop_footer
      %s17 = sadd.s32 1, %s13
    $region7: #{tpu_custom_call.1} parent=1 // loop_footer_branch
      %12 = sbr.rel target = $region3
    $region8: #{tpu_custom_call.1} parent=1 // loop_exit
      _
    %757 = vsyncpa [#allocation8], 1
    %s758 = scalar_lea.sflag [#allocation8], 1
    %759 = vsyncpa %s758, 1

</llo_original>
